<compile_context>
chip_gen: v6e
topology: v6e:2x2x1
jax: 0.10.0
libtpu: 0.0.40
codegen_flags: <defaults>
</compile_context>

<pallas_src>
import math

import jax
import jax.numpy as jnp
from jax.experimental import pallas as pl
from jax.experimental.pallas import tpu as pltpu

# Per-block VMEM budget. BlockSpec double-buffers input and output, so resident
# VMEM ~= 4 x block bytes = 8 MiB -- under the scoped-VMEM defaults on v5e
# (16 MiB), v6e (32 MiB) and v7x (32 MiB scoped / 64 MiB physical).
_MAX_BLOCK_BYTES = 2 * 1024 * 1024
_LANE_CANDIDATES = (4096, 2048, 1024, 512, 256, 128)


def _copy_kernel(x_ref, o_ref):
    # Pure element-wise copy of the current lane-dense block.
    o_ref[...] = x_ref[...]


def _divisors(n):
    ds = []
    i = 1
    while i * i <= n:
        if n % i == 0:
            ds.append(i)
            ds.append(n // i)
        i += 1
    return ds


def _choose_lanes(total):
    # Widest lane dimension (multiple of 128) dividing the flat size.
    for lanes in _LANE_CANDIDATES:
        if total % lanes == 0:
            return lanes
    return None


def _choose_row_tile(rows, lanes, itemsize):
    max_rows = max(1, _MAX_BLOCK_BYTES // (lanes * itemsize))
    if rows <= max_rows:
        # Whole slab fits the block budget: block dim == full array dim is
        # exempt from the (8,128) divisibility rule.
        return rows
    # Prefer the largest divisor of `rows` within budget that keeps native
    # sublane tiling: multiples of 32 cover f32 (8,128) / bf16 (16,128) /
    # int8-fp8 (32,128); then multiples of 8; full blocks, exact grid.
    divs = sorted(d for d in _divisors(rows) if d <= max_rows)
    for align in (32, 8):
        cand = [d for d in divs if d % align == 0]
        if cand:
            return cand[-1]
    # Pathological row count (no aligned divisor in budget): use a multiple-of-8
    # tile with a cdiv grid; Pallas masks the partial boundary block.
    return max(8, (max_rows // 8) * 8)


def _tiled_copy_2d(flat, total):
    """Copy a 128-aligned flat array through lane-dense (row_tile, lanes) blocks."""
    itemsize = jnp.dtype(flat.dtype).itemsize
    lanes = _choose_lanes(total)
    rows = total // lanes
    row_tile = _choose_row_tile(rows, lanes, itemsize)
    x2 = flat.reshape(rows, lanes)
    grid = (pl.cdiv(rows, row_tile),)
    out2 = pl.pallas_call(
        _copy_kernel,
        out_shape=jax.ShapeDtypeStruct((rows, lanes), flat.dtype),
        grid=grid,
        in_specs=[pl.BlockSpec((row_tile, lanes), lambda i: (i, 0))],
        out_specs=pl.BlockSpec((row_tile, lanes), lambda i: (i, 0)),
        compiler_params=pltpu.CompilerParams(
            dimension_semantics=("parallel",)),  # shards across v7x's 2 TCs
        cost_estimate=pl.CostEstimate(
            flops=0, transcendentals=0, bytes_accessed=2 * total * itemsize),
    )(x2)
    return out2.reshape(total)


def _small_copy_1d(flat_piece):
    """Copy a short (<128 element) remainder as a single full-extent block."""
    n = flat_piece.shape[0]
    itemsize = jnp.dtype(flat_piece.dtype).itemsize
    x2 = flat_piece.reshape(1, n)
    out = pl.pallas_call(
        _copy_kernel,
        out_shape=jax.ShapeDtypeStruct((1, n), flat_piece.dtype),
        in_specs=[pl.BlockSpec((1, n), lambda: (0, 0))],
        out_specs=pl.BlockSpec((1, n), lambda: (0, 0)),
        cost_estimate=pl.CostEstimate(
            flops=0, transcendentals=0, bytes_accessed=2 * n * itemsize),
    )(x2)
    return out.reshape(n)


def pallas_view(x, shape: int):
    """Equivalent of torch View(shape): flatten x (row-major) to a 1-D array of
    length `shape`, with the data movement done inside Pallas kernels.

    Note: a row-major flatten is logically free (x.reshape(shape) is a metadata
    reshape); the Pallas copy exists to express the op as an explicit kernel."""
    total = math.prod(x.shape)
    assert total == shape, f"view size mismatch: {total} vs {shape}"

    flat = x.reshape(-1)  # zero-cost metadata reshape, row-major order

    if total % 128 == 0:
        return _tiled_copy_2d(flat, total).reshape(shape)

    # Non-lane-aligned size: tiled copy of the 128-aligned prefix plus a tiny
    # full-extent block for the (<128 element) remainder -- never stages the
    # whole array in VMEM as one block.
    main = (total // 128) * 128
    pieces = []
    if main > 0:
        pieces.append(_tiled_copy_2d(flat[:main], main))
    pieces.append(_small_copy_1d(flat[main:]))
    out = pieces[0] if len(pieces) == 1 else jnp.concatenate(pieces)
    return out.reshape(shape)


if __name__ == "__main__":
    key = jax.random.PRNGKey(0)

    # Small NCHW input consistent with a CNN feature map (lane-aligned size).
    x = jax.random.normal(key, (2, 4, 16, 16), dtype=jnp.float32)
    target = 2 * 4 * 16 * 16  # View(2*4*16*16) flattens everything to 1-D
    y = jax.block_until_ready(pallas_view(x, target))
    ref = x.reshape(target)
    assert y.shape == (target,), y.shape
    assert y.dtype == x.dtype
    assert bool(jnp.array_equal(y, ref)), "mismatch vs reference flatten (aligned)"

    # Also exercise the non-128-aligned fallback path (prefix + remainder).
    x2 = jax.random.normal(jax.random.PRNGKey(0), (2, 3, 5, 7), dtype=jnp.float32)
    target2 = 2 * 3 * 5 * 7
    y2 = jax.block_until_ready(pallas_view(x2, target2))
    assert bool(jnp.array_equal(y2, x2.reshape(target2))), "mismatch (unaligned)"

    print("KERNEL_OK")
</pallas_src>

<mosaic_0001>
module attributes {stable_mosaic.version = 11 : i64} {
  func.func @_copy_kernel(%arg0: i32, %arg1: memref<1x2048xf32, #tpu.memory_space<vmem>>, %arg2: memref<1x2048xf32, #tpu.memory_space<vmem>>) attributes {dimension_semantics = [#tpu.dimension_semantics<parallel>], iteration_bounds = array<i64: 1>, scalar_prefetch = 0 : i64, scratch_operands = 0 : i64, tpu.core_type = #tpu.core_type<tc>, window_params = [{transform_indices = @transform_0, window_bounds = array<i64: 1, 2048>}, {transform_indices = @transform_1, window_bounds = array<i64: 1, 2048>}]} {
    %c0 = arith.constant 0 : index
    %c0_0 = arith.constant 0 : index
    %0 = vector.load %arg1[%c0, %c0_0] : memref<1x2048xf32, #tpu.memory_space<vmem>>, vector<1x2048xf32>
    %c0_1 = arith.constant 0 : index
    %c0_2 = arith.constant 0 : index
    %1 = vector.load %arg2[%c0_1, %c0_2] : memref<1x2048xf32, #tpu.memory_space<vmem>>, vector<1x2048xf32>
    tpu.vector_store %arg2[%c0_1, %c0_2], %0 {strides = array<i32>} : memref<1x2048xf32, #tpu.memory_space<vmem>>, vector<1x2048xf32>,
    return
  }
  func.func @transform_0(%arg0: i32) -> (i32, i32) {
    %c0_i32 = arith.constant 0 : i32
    %c0_i32_0 = arith.constant 0 : i32
    return %arg0, %c0_i32 : i32, i32
  }
  func.func @transform_1(%arg0: i32) -> (i32, i32) {
    %c0_i32 = arith.constant 0 : i32
    %c0_i32_0 = arith.constant 0 : i32
    return %arg0, %c0_i32 : i32, i32
  }
}

</mosaic_0001>

<llo_original>
// kernel: tpu_custom_call.1
$region0: #{tpu_custom_call.1}
  #allocation0 [shape = 'u32[]', space=smem, size = 0x4, offset = 0x4, fixed_abs, tag = 'smem constant byte address 0x4 - core index']
  #allocation1 [shape = 'u32[144,128]{1,0:T(1,128)}', space=vmem, size = 0x12000, scoped, tag = 'internal scratch']
  %s0 = inlined_call_operand.hbm [shape: f32[1,2048], index: 0, kind: input, shape index: {}]
  %s1 = inlined_call_operand.hbm [shape: f32[1,2048], index: 1, kind: output, shape index: {}]
  %s2 = sld [smem:[#allocation0]]
  $region18: #{tpu_custom_call.1} parent=0
    _
  %s4 = ssub.s32 1, %s2
  %s5 = scalar_select 0, %s4, %s2
  $region1: #{tpu_custom_call.1} parent=0
    #allocation2 [shape = 'u8[8192]{0}', space=vmem, size = 0x2000, scoped, tag = 'input window, operand 0, single buffered']
    #allocation3 [shape = 's32[1]{0}', space=sflag, size = 0x4, scoped, tag = 'scoped memory for tpu_custom_call.1']
    #allocation4 [shape = 's32[1]{0}', space=sflag, size = 0x4, scoped, tag = 'scoped memory for tpu_custom_call.1']
    #allocation5 [shape = 'u8[8192]{0}', space=vmem, size = 0x2000, scoped, tag = 'output window, operand 0, single buffered']
    %6 = vsyncpa [#allocation3], 0
    %7 = vsyncpa [#allocation4], 0
    // Predicated region
    $region2: #{tpu_custom_call.1} parent=1 // pred_check
      _
    $region3: #{tpu_custom_call.1} parent=1 // pred_check_branch
      %9 = sbr.rel (0) target = $region5
    $region4: #{tpu_custom_call.1} parent=1 // pred_region
      %s11 = ssub.s32 256, 256
      %12 = vsyncadd [#allocation3], %s11
      %s14 = sshll.u32 [#allocation2], 4
      %s15 = int_to_ptr.vmem [resolvable:$true] %s14
      %17 = dma.hbm_to_vmem [thread:$0]  %s0, 256, %s15, [#allocation3]
    $region5: #{tpu_custom_call.1} parent=1 // pred_fallthru
      _
    // Predicated region
    $region6: #{tpu_custom_call.1} parent=1 // pred_check
      _
    $region7: #{tpu_custom_call.1} parent=1 // pred_check_branch
      %19 = sbr.rel (0) target = $region9
    $region8: #{tpu_custom_call.1} parent=1 // pred_region
      %20 = dma.done [#allocation3], 256
    $region9: #{tpu_custom_call.1} parent=1 // pred_fallthru
      _
    %v21 = vld [vmem:[#allocation2] sm:$0xff]
    %v22 = vld [vmem:[#allocation2 + $0x8] sm:$0xff]
    %23 = vst [vmem:[#allocation5] sm:$0xff] %v21
    %24 = vst [vmem:[#allocation5 + $0x8] sm:$0xff] %v22
    // Predicated region
    $region10: #{tpu_custom_call.1} parent=1 // pred_check
      _
    $region11: #{tpu_custom_call.1} parent=1 // pred_check_branch
      %26 = sbr.rel (0) target = $region13
    $region12: #{tpu_custom_call.1} parent=1 // pred_region
      %s28 = ssub.s32 256, 256
      %29 = vsyncadd [#allocation4], %s28
      %s31 = sshll.u32 [#allocation5], 4
      %s32 = int_to_ptr.vmem [resolvable:$true] %s31
      %34 = dma.vmem_to_hbm [thread:$0]  %s32, 256, %s1, [#allocation4]
    $region13: #{tpu_custom_call.1} parent=1 // pred_fallthru
      _
    // Predicated region
    $region14: #{tpu_custom_call.1} parent=1 // pred_check
      _
    $region15: #{tpu_custom_call.1} parent=1 // pred_check_branch
      %36 = sbr.rel (0) target = $region17
    $region16: #{tpu_custom_call.1} parent=1 // pred_region
      %37 = dma.done [#allocation4], 256
    $region17: #{tpu_custom_call.1} parent=1 // pred_fallthru
      _
    %38 = vsyncpa [#allocation3], 1
    %39 = vsyncpa [#allocation4], 1

</llo_original>
